<compile_context>
chip_gen: v7x
topology: tpu7x:2x2x1
jax: 0.10.0
libtpu: 0.0.40
codegen_flags: <defaults>
</compile_context>

<pallas_src>
import functools
import math

import jax
import jax.numpy as jnp
import numpy as np
from jax import lax
from jax.experimental import pallas as pl
from jax.experimental.pallas import tpu as pltpu

EPS = 1e-5


def _block_kernel(x_ref, hidx_ref, widx_ref,
                  w1_ref, g1_ref, b1_ref,
                  w2_ref, g2_ref, b2_ref,
                  o_ref, *, H, W, conv_bf16):
    """Fused residual block in a channels-on-sublanes / positions-on-lanes layout.

    x_ref    : (Cp, M)      input, M = N*H*W flattened positions (lane dim);
                            channel rows padded to Cp (multiple of 8), pad rows = 0
    hidx_ref : (1, M) int32 spatial row index of each flattened position
    widx_ref : (1, M) int32 spatial col index of each flattened position
    w1_ref   : (Cp, 9*Cp)   conv1 weight, [co, (kh*3 + kw)*Cp + ci]
    g1_ref   : (Cp, 1)      BN1 gamma (pad rows = 1)
    b1_ref   : (Cp, 1)      BN1 beta  (pad rows = 0)
    w2_ref, g2_ref, b2_ref  : same for conv2 / BN2
    o_ref    : (Cp, M)      output
    """
    Cp, M = x_ref.shape

    # Hoisted single reads (no re-broadcast inside any loop).
    x = x_ref[...]
    w1 = w1_ref[...]
    w2 = w2_ref[...]
    g1 = g1_ref[...]
    b1 = b1_ref[...]
    g2 = g2_ref[...]
    b2 = b2_ref[...]
    h_idx = hidx_ref[...]
    w_idx = widx_ref[...]

    # Per-tap validity masks implement the 3x3 zero padding in-kernel.
    # Computed once; shared by both convs.
    h_ok = {-1: h_idx >= 1, 0: None, 1: h_idx <= H - 2}
    w_ok = {-1: w_idx >= 1, 0: None, 1: w_idx <= W - 2}

    def tap_mask(dy, dx):
        mh, mw = h_ok[dy], w_ok[dx]
        if mh is None:
            return mw
        if mw is None:
            return mh
        return jnp.logical_and(mh, mw)

    def im2col(a):
        # a: (Cp, M) -> (9*Cp, M). Piece k holds a shifted by the k-th 3x3 tap:
        # piece[:, m] = a[:, m + dy*W + dx] if (h+dy, w+dx) in-bounds else 0.
        pieces = []
        for dy in (-1, 0, 1):
            for dx in (-1, 0, 1):
                s = dy * W + dx
                if s == 0:
                    shifted = a
                else:
                    # pltpu.roll == np.roll: roll(a, k)[:, m] = a[:, (m - k) % M]
                    shifted = pltpu.roll(a, (-s) % M, axis=1)
                mask = tap_mask(dy, dx)
                if mask is not None:
                    shifted = jnp.where(mask, shifted, 0.0)
                pieces.append(shifted)
        # Each piece is exactly Cp (multiple of 8) sublanes -> aligned concat.
        return jnp.concatenate(pieces, axis=0)

    def conv3x3(a, wmat):
        patches = im2col(a)                      # (9*Cp, M)
        if conv_bf16:
            # bf16 MXU operands, f32 accumulation (v6e/v7x fast path).
            return jnp.dot(wmat.astype(jnp.bfloat16),
                           patches.astype(jnp.bfloat16),
                           preferred_element_type=jnp.float32)
        return jnp.dot(wmat, patches, preferred_element_type=jnp.float32)

    inv_m = jnp.float32(1.0 / M)

    def bn(a, g, b, relu):
        # One-pass batch statistics (biased variance), per channel row.
        s1 = jnp.sum(a, axis=1, keepdims=True)
        s2 = jnp.sum(a * a, axis=1, keepdims=True)
        mean = s1 * inv_m
        var = jnp.maximum(s2 * inv_m - mean * mean, 0.0)
        scale = lax.rsqrt(var + EPS) * g          # (Cp, 1)
        shift = b - mean * scale                  # (Cp, 1)
        out = a * scale + shift                   # single FMA over (Cp, M)
        return jnp.maximum(out, 0.0) if relu else out

    h1 = bn(conv3x3(x, w1), g1, b1, relu=True)
    h2 = bn(conv3x3(h1, w2), g2, b2, relu=False)

    # Residual path: downsampling=None -> NoNorm -> identity (stride == 1).
    o_ref[...] = jnp.maximum(h2 + x, 0.0)


def block_forward(x_nchw, w1_hwio, g1, b1, w2_hwio, g2, b2,
                  stride=1, conv_bf16=False):
    """Pallas implementation of block.forward. Input/output are NCHW.

    conv_bf16=True casts only the conv matmul operands to bf16 (f32 accum),
    the fast MXU path on v6e/v7x; BN/ReLU math stays f32 (v5e has no bf16 VPU).
    """
    # TODO(synk): stride > 1 with a projection downsample is not implemented;
    # the module's downsampling=None -> NoNorm identity path forces stride == 1
    # and in_channels == out_channels.
    assert stride == 1, "identity residual path requires stride == 1"
    N, Cin, H, W = x_nchw.shape
    Cout = w1_hwio.shape[-1]
    assert Cin == Cout, "identity residual path requires in_channels == out_channels"
    C = Cin
    Cp = max(8, ((C + 7) // 8) * 8)   # pad channels to the f32 sublane tile
    M = N * H * W

    f32 = jnp.float32
    # NCHW -> (C, N*H*W), channels padded to Cp. XLA fuses transpose/reshape/pad
    # into one relayout copy; there is no separate spatial-pad HBM round trip
    # (the 3x3 halo is handled in-kernel with masks).
    xT = jnp.transpose(x_nchw.astype(f32), (1, 0, 2, 3)).reshape(C, M)
    xT = jnp.pad(xT, ((0, Cp - C), (0, 0)))

    def prep_w(w):
        wp = jnp.zeros((3, 3, Cp, Cp), f32).at[:, :, :C, :C].set(w.astype(f32))
        # (kh, kw, ci, co) -> (co, kh, kw, ci) -> (Cp, 9*Cp)
        return jnp.transpose(wp, (3, 0, 1, 2)).reshape(Cp, 9 * Cp)

    def prep_gb(v, fill):
        v = jnp.reshape(v.astype(f32), (C,))
        return jnp.pad(v, (0, Cp - C), constant_values=fill).reshape(Cp, 1)

    w1m, w2m = prep_w(w1_hwio), prep_w(w2_hwio)
    g1p, b1p = prep_gb(g1, 1.0), prep_gb(b1, 0.0)
    g2p, b2p = prep_gb(g2, 1.0), prep_gb(b2, 0.0)

    # Precomputed spatial indices (avoids in-kernel integer div/mod).
    pos = jnp.arange(M, dtype=jnp.int32)
    h_idx = ((pos // W) % H).reshape(1, M)
    w_idx = (pos % W).reshape(1, M)

    def full_spec(shape):
        nd = len(shape)
        return pl.BlockSpec(shape, lambda i, _nd=nd: (0,) * _nd)

    kernel = functools.partial(_block_kernel, H=H, W=W, conv_bf16=conv_bf16)

    # TODO(synk): for production ResNet sizes, tile M over a "parallel" grid
    # axis with two-pass BN stats (per-tile sum / sum-of-squares, then a cheap
    # normalize pass) so the block fits v7x's 64 MiB VMEM and uses both
    # TensorCores; at this validation shape everything is resident.
    out = pl.pallas_call(
        kernel,
        out_shape=jax.ShapeDtypeStruct((Cp, M), f32),
        grid=(1,),
        in_specs=[
            full_spec(xT.shape),
            full_spec(h_idx.shape),
            full_spec(w_idx.shape),
            full_spec(w1m.shape),
            full_spec(g1p.shape),
            full_spec(b1p.shape),
            full_spec(w2m.shape),
            full_spec(g2p.shape),
            full_spec(b2p.shape),
        ],
        out_specs=full_spec((Cp, M)),
        compiler_params=pltpu.CompilerParams(
            dimension_semantics=("arbitrary",)),
    )(xT, h_idx, w_idx, w1m, g1p, b1p, w2m, g2p, b2p)

    out = out[:C].reshape(C, N, H, W)
    return jnp.transpose(out, (1, 0, 2, 3))


def block_reference(x_nchw, w1_hwio, g1, b1, w2_hwio, g2, b2):
    """Pure-JAX reference of the same forward pass (for validation)."""
    x = jnp.transpose(x_nchw, (0, 2, 3, 1)).astype(jnp.float32)

    def conv3x3(a, w):
        return jax.lax.conv_general_dilated(
            a, w, window_strides=(1, 1), padding=((1, 1), (1, 1)),
            dimension_numbers=("NHWC", "HWIO", "NHWC"),
            precision=jax.lax.Precision.HIGHEST)

    def bn(a, g, b):
        m = jnp.mean(a, axis=(0, 1, 2), keepdims=True)
        v = jnp.mean((a - m) ** 2, axis=(0, 1, 2), keepdims=True)
        return (a - m) * jax.lax.rsqrt(v + EPS) * g.reshape(1, 1, 1, -1) \
            + b.reshape(1, 1, 1, -1)

    out = jnp.maximum(bn(conv3x3(x, w1_hwio), g1, b1), 0.0)
    out = bn(conv3x3(out, w2_hwio), g2, b2)
    out = jnp.maximum(out + x, 0.0)
    return jnp.transpose(out, (0, 3, 1, 2))


if __name__ == "__main__":
    # Small shapes consistent with the module: batch=2, channels=4, spatial=16.
    N, C, H, W = 2, 4, 16, 16
    key = jax.random.PRNGKey(0)
    kx, kw1, kw2, kg1, kb1, kg2, kb2 = jax.random.split(key, 7)

    x = jax.random.normal(kx, (N, C, H, W), jnp.float32)

    fan_in = C * 3 * 3
    w1 = jax.random.normal(kw1, (3, 3, C, C), jnp.float32) / math.sqrt(fan_in)
    w2 = jax.random.normal(kw2, (3, 3, C, C), jnp.float32) / math.sqrt(fan_in)
    g1 = 1.0 + 0.1 * jax.random.normal(kg1, (1, C), jnp.float32)
    b1 = 0.1 * jax.random.normal(kb1, (1, C), jnp.float32)
    g2 = 1.0 + 0.1 * jax.random.normal(kg2, (1, C), jnp.float32)
    b2 = 0.1 * jax.random.normal(kb2, (1, C), jnp.float32)

    ref = jax.block_until_ready(block_reference(x, w1, g1, b1, w2, g2, b2))

    # f32 conv path.
    out = jax.block_until_ready(block_forward(x, w1, g1, b1, w2, g2, b2))
    assert out.shape == (N, C, H, W)
    assert bool(jnp.all(jnp.isfinite(out)))
    np.testing.assert_allclose(np.asarray(out), np.asarray(ref),
                               rtol=5e-2, atol=5e-2)

    # bf16 MXU-operand fast path (v6e/v7x); f32 accumulation keeps it close.
    out_bf16 = jax.block_until_ready(
        block_forward(x, w1, g1, b1, w2, g2, b2, conv_bf16=True))
    assert bool(jnp.all(jnp.isfinite(out_bf16)))
    np.testing.assert_allclose(np.asarray(out_bf16), np.asarray(ref),
                               rtol=1e-1, atol=1e-1)

    print("KERNEL_OK")
</pallas_src>

<mosaic_0001>
module attributes {stable_mosaic.version = 11 : i64} {
  func.func @_block_kernel(%arg0: i32, %arg1: memref<8x512xf32, #tpu.memory_space<vmem>>, %arg2: memref<1x512xi32, #tpu.memory_space<vmem>>, %arg3: memref<1x512xi32, #tpu.memory_space<vmem>>, %arg4: memref<8x72xf32, #tpu.memory_space<vmem>>, %arg5: memref<8x1xf32, #tpu.memory_space<vmem>>, %arg6: memref<8x1xf32, #tpu.memory_space<vmem>>, %arg7: memref<8x72xf32, #tpu.memory_space<vmem>>, %arg8: memref<8x1xf32, #tpu.memory_space<vmem>>, %arg9: memref<8x1xf32, #tpu.memory_space<vmem>>, %arg10: memref<8x512xf32, #tpu.memory_space<vmem>>) attributes {dimension_semantics = [#tpu.dimension_semantics<arbitrary>], iteration_bounds = array<i64: 1>, scalar_prefetch = 0 : i64, scratch_operands = 0 : i64, tpu.core_type = #tpu.core_type<tc>, window_params = [{pipeline_mode = #tpu.pipeline_mode<synchronous>, transform_indices = @transform_0, window_bounds = array<i64: 8, 512>}, {pipeline_mode = #tpu.pipeline_mode<synchronous>, transform_indices = @transform_1, window_bounds = array<i64: 1, 512>}, {pipeline_mode = #tpu.pipeline_mode<synchronous>, transform_indices = @transform_2, window_bounds = array<i64: 1, 512>}, {pipeline_mode = #tpu.pipeline_mode<synchronous>, transform_indices = @transform_3, window_bounds = array<i64: 8, 72>}, {pipeline_mode = #tpu.pipeline_mode<synchronous>, transform_indices = @transform_4, window_bounds = array<i64: 8, 1>}, {pipeline_mode = #tpu.pipeline_mode<synchronous>, transform_indices = @transform_5, window_bounds = array<i64: 8, 1>}, {pipeline_mode = #tpu.pipeline_mode<synchronous>, transform_indices = @transform_6, window_bounds = array<i64: 8, 72>}, {pipeline_mode = #tpu.pipeline_mode<synchronous>, transform_indices = @transform_7, window_bounds = array<i64: 8, 1>}, {pipeline_mode = #tpu.pipeline_mode<synchronous>, transform_indices = @transform_8, window_bounds = array<i64: 8, 1>}, {pipeline_mode = #tpu.pipeline_mode<synchronous>, transform_indices = @transform_9, window_bounds = array<i64: 8, 512>}]} {
    %c0 = arith.constant 0 : index
    %c0_0 = arith.constant 0 : index
    %0 = vector.load %arg1[%c0, %c0_0] : memref<8x512xf32, #tpu.memory_space<vmem>>, vector<8x512xf32>
    %c0_1 = arith.constant 0 : index
    %c0_2 = arith.constant 0 : index
    %1 = vector.load %arg4[%c0_1, %c0_2] : memref<8x72xf32, #tpu.memory_space<vmem>>, vector<8x72xf32>
    %c0_3 = arith.constant 0 : index
    %c0_4 = arith.constant 0 : index
    %2 = vector.load %arg7[%c0_3, %c0_4] : memref<8x72xf32, #tpu.memory_space<vmem>>, vector<8x72xf32>
    %c0_5 = arith.constant 0 : index
    %c0_6 = arith.constant 0 : index
    %3 = vector.load %arg5[%c0_5, %c0_6] : memref<8x1xf32, #tpu.memory_space<vmem>>, vector<8x1xf32>
    %c0_7 = arith.constant 0 : index
    %c0_8 = arith.constant 0 : index
    %4 = vector.load %arg6[%c0_7, %c0_8] : memref<8x1xf32, #tpu.memory_space<vmem>>, vector<8x1xf32>
    %c0_9 = arith.constant 0 : index
    %c0_10 = arith.constant 0 : index
    %5 = vector.load %arg8[%c0_9, %c0_10] : memref<8x1xf32, #tpu.memory_space<vmem>>, vector<8x1xf32>
    %c0_11 = arith.constant 0 : index
    %c0_12 = arith.constant 0 : index
    %6 = vector.load %arg9[%c0_11, %c0_12] : memref<8x1xf32, #tpu.memory_space<vmem>>, vector<8x1xf32>
    %c0_13 = arith.constant 0 : index
    %c0_14 = arith.constant 0 : index
    %7 = vector.load %arg2[%c0_13, %c0_14] : memref<1x512xi32, #tpu.memory_space<vmem>>, vector<1x512xi32>
    %c0_15 = arith.constant 0 : index
    %c0_16 = arith.constant 0 : index
    %8 = vector.load %arg3[%c0_15, %c0_16] : memref<1x512xi32, #tpu.memory_space<vmem>>, vector<1x512xi32>
    %c1_i32 = arith.constant 1 : i32
    %9 = vector.broadcast %c1_i32 : i32 to vector<1x512xi32>
    %10 = arith.cmpi sge, %7, %9 : vector<1x512xi32>
    %c14_i32 = arith.constant 14 : i32
    %11 = vector.broadcast %c14_i32 : i32 to vector<1x512xi32>
    %12 = arith.cmpi sle, %7, %11 : vector<1x512xi32>
    %c1_i32_17 = arith.constant 1 : i32
    %13 = vector.broadcast %c1_i32_17 : i32 to vector<1x512xi32>
    %14 = arith.cmpi sge, %8, %13 : vector<1x512xi32>
    %c14_i32_18 = arith.constant 14 : i32
    %15 = vector.broadcast %c14_i32_18 : i32 to vector<1x512xi32>
    %16 = arith.cmpi sle, %8, %15 : vector<1x512xi32>
    %c17_i32 = arith.constant 17 : i32
    %17 = tpu.dynamic_rotate %0 by %c17_i32 dim 1 : vector<8x512xf32>, i32 -> vector<8x512xf32>
    %18 = arith.andi %10, %14 : vector<1x512xi1>
    %cst = arith.constant 0.000000e+00 : f32
    %19 = vector.shape_cast %18 : vector<1x512xi1> to vector<1x512xi1>
    %20 = vector.broadcast %19 : vector<1x512xi1> to vector<8x512xi1>
    %21 = vector.broadcast %cst : f32 to vector<8x512xf32>
    %22 = arith.select %20, %17, %21 : vector<8x512xi1>, vector<8x512xf32>
    %c16_i32 = arith.constant 16 : i32
    %23 = tpu.dynamic_rotate %0 by %c16_i32 dim 1 : vector<8x512xf32>, i32 -> vector<8x512xf32>
    %cst_19 = arith.constant 0.000000e+00 : f32
    %24 = vector.shape_cast %10 : vector<1x512xi1> to vector<1x512xi1>
    %25 = vector.broadcast %24 : vector<1x512xi1> to vector<8x512xi1>
    %26 = vector.broadcast %cst_19 : f32 to vector<8x512xf32>
    %27 = arith.select %25, %23, %26 : vector<8x512xi1>, vector<8x512xf32>
    %c15_i32 = arith.constant 15 : i32
    %28 = tpu.dynamic_rotate %0 by %c15_i32 dim 1 : vector<8x512xf32>, i32 -> vector<8x512xf32>
    %29 = arith.andi %10, %16 : vector<1x512xi1>
    %cst_20 = arith.constant 0.000000e+00 : f32
    %30 = vector.shape_cast %29 : vector<1x512xi1> to vector<1x512xi1>
    %31 = vector.broadcast %30 : vector<1x512xi1> to vector<8x512xi1>
    %32 = vector.broadcast %cst_20 : f32 to vector<8x512xf32>
    %33 = arith.select %31, %28, %32 : vector<8x512xi1>, vector<8x512xf32>
    %c1_i32_21 = arith.constant 1 : i32
    %34 = tpu.dynamic_rotate %0 by %c1_i32_21 dim 1 : vector<8x512xf32>, i32 -> vector<8x512xf32>
    %cst_22 = arith.constant 0.000000e+00 : f32
    %35 = vector.shape_cast %14 : vector<1x512xi1> to vector<1x512xi1>
    %36 = vector.broadcast %35 : vector<1x512xi1> to vector<8x512xi1>
    %37 = vector.broadcast %cst_22 : f32 to vector<8x512xf32>
    %38 = arith.select %36, %34, %37 : vector<8x512xi1>, vector<8x512xf32>
    %c511_i32 = arith.constant 511 : i32
    %39 = tpu.dynamic_rotate %0 by %c511_i32 dim 1 : vector<8x512xf32>, i32 -> vector<8x512xf32>
    %cst_23 = arith.constant 0.000000e+00 : f32
    %40 = vector.shape_cast %16 : vector<1x512xi1> to vector<1x512xi1>
    %41 = vector.broadcast %40 : vector<1x512xi1> to vector<8x512xi1>
    %42 = vector.broadcast %cst_23 : f32 to vector<8x512xf32>
    %43 = arith.select %41, %39, %42 : vector<8x512xi1>, vector<8x512xf32>
    %c497_i32 = arith.constant 497 : i32
    %44 = tpu.dynamic_rotate %0 by %c497_i32 dim 1 : vector<8x512xf32>, i32 -> vector<8x512xf32>
    %45 = arith.andi %12, %14 : vector<1x512xi1>
    %cst_24 = arith.constant 0.000000e+00 : f32
    %46 = vector.shape_cast %45 : vector<1x512xi1> to vector<1x512xi1>
    %47 = vector.broadcast %46 : vector<1x512xi1> to vector<8x512xi1>
    %48 = vector.broadcast %cst_24 : f32 to vector<8x512xf32>
    %49 = arith.select %47, %44, %48 : vector<8x512xi1>, vector<8x512xf32>
    %c496_i32 = arith.constant 496 : i32
    %50 = tpu.dynamic_rotate %0 by %c496_i32 dim 1 : vector<8x512xf32>, i32 -> vector<8x512xf32>
    %cst_25 = arith.constant 0.000000e+00 : f32
    %51 = vector.shape_cast %12 : vector<1x512xi1> to vector<1x512xi1>
    %52 = vector.broadcast %51 : vector<1x512xi1> to vector<8x512xi1>
    %53 = vector.broadcast %cst_25 : f32 to vector<8x512xf32>
    %54 = arith.select %52, %50, %53 : vector<8x512xi1>, vector<8x512xf32>
    %c495_i32 = arith.constant 495 : i32
    %55 = tpu.dynamic_rotate %0 by %c495_i32 dim 1 : vector<8x512xf32>, i32 -> vector<8x512xf32>
    %56 = arith.andi %12, %16 : vector<1x512xi1>
    %cst_26 = arith.constant 0.000000e+00 : f32
    %57 = vector.shape_cast %56 : vector<1x512xi1> to vector<1x512xi1>
    %58 = vector.broadcast %57 : vector<1x512xi1> to vector<8x512xi1>
    %59 = vector.broadcast %cst_26 : f32 to vector<8x512xf32>
    %60 = arith.select %58, %55, %59 : vector<8x512xi1>, vector<8x512xf32>
    %61 = tpu.concatenate %22, %27, %33, %38, %0, %43, %49, %54, %60 in 0 : vector<8x512xf32>, vector<8x512xf32>, vector<8x512xf32>, vector<8x512xf32>, vector<8x512xf32>, vector<8x512xf32>, vector<8x512xf32>, vector<8x512xf32>, vector<8x512xf32> -> vector<72x512xf32>
    %cst_27 = arith.constant dense<0.000000e+00> : vector<8x512xf32>
    %62 = tpu.matmul %1, %61, %cst_27 {dimension_numbers = #tpu.dot_dimension_numbers<[1], [0], [0], [1], [0, 0, 1, 1], [], []>} : vector<8x72xf32>, vector<72x512xf32>, vector<8x512xf32> -> vector<8x512xf32>
    %cst_28 = arith.constant dense<0.000000e+00> : vector<8xf32>
    %63 = vector.multi_reduction <add>, %62, %cst_28 [1] : vector<8x512xf32> to vector<8xf32>
    %64 = vector.shape_cast %63 : vector<8xf32> to vector<8x1xf32>
    %65 = arith.mulf %62, %62 : vector<8x512xf32>
    %cst_29 = arith.constant dense<0.000000e+00> : vector<8xf32>
    %66 = vector.multi_reduction <add>, %65, %cst_29 [1] : vector<8x512xf32> to vector<8xf32>
    %67 = vector.shape_cast %66 : vector<8xf32> to vector<8x1xf32>
    %cst_30 = arith.constant 0.001953125 : f32
    %68 = vector.broadcast %cst_30 : f32 to vector<8x1xf32>
    %69 = arith.mulf %64, %68 : vector<8x1xf32>
    %cst_31 = arith.constant 0.001953125 : f32
    %70 = vector.broadcast %cst_31 : f32 to vector<8x1xf32>
    %71 = arith.mulf %67, %70 : vector<8x1xf32>
    %72 = arith.mulf %69, %69 : vector<8x1xf32>
    %73 = arith.subf %71, %72 : vector<8x1xf32>
    %cst_32 = arith.constant 0.000000e+00 : f32
    %74 = vector.broadcast %cst_32 : f32 to vector<8x1xf32>
    %75 = arith.maximumf %73, %74 : vector<8x1xf32>
    %cst_33 = arith.constant 9.99999974E-6 : f32
    %76 = vector.broadcast %cst_33 : f32 to vector<8x1xf32>
    %77 = arith.addf %75, %76 : vector<8x1xf32>
    %78 = math.rsqrt %77 : vector<8x1xf32>
    %79 = arith.mulf %78, %3 : vector<8x1xf32>
    %80 = arith.mulf %69, %79 : vector<8x1xf32>
    %81 = arith.subf %4, %80 : vector<8x1xf32>
    %82 = vector.broadcast %79 : vector<8x1xf32> to vector<8x512xf32>
    %83 = arith.mulf %62, %82 : vector<8x512xf32>
    %84 = vector.broadcast %81 : vector<8x1xf32> to vector<8x512xf32>
    %85 = arith.addf %83, %84 : vector<8x512xf32>
    %cst_34 = arith.constant 0.000000e+00 : f32
    %86 = vector.broadcast %cst_34 : f32 to vector<8x512xf32>
    %87 = arith.maximumf %85, %86 : vector<8x512xf32>
    %c17_i32_35 = arith.constant 17 : i32
    %88 = tpu.dynamic_rotate %87 by %c17_i32_35 dim 1 : vector<8x512xf32>, i32 -> vector<8x512xf32>
    %89 = arith.andi %10, %14 : vector<1x512xi1>
    %cst_36 = arith.constant 0.000000e+00 : f32
    %90 = vector.shape_cast %89 : vector<1x512xi1> to vector<1x512xi1>
    %91 = vector.broadcast %90 : vector<1x512xi1> to vector<8x512xi1>
    %92 = vector.broadcast %cst_36 : f32 to vector<8x512xf32>
    %93 = arith.select %91, %88, %92 : vector<8x512xi1>, vector<8x512xf32>
    %c16_i32_37 = arith.constant 16 : i32
    %94 = tpu.dynamic_rotate %87 by %c16_i32_37 dim 1 : vector<8x512xf32>, i32 -> vector<8x512xf32>
    %cst_38 = arith.constant 0.000000e+00 : f32
    %95 = vector.shape_cast %10 : vector<1x512xi1> to vector<1x512xi1>
    %96 = vector.broadcast %95 : vector<1x512xi1> to vector<8x512xi1>
    %97 = vector.broadcast %cst_38 : f32 to vector<8x512xf32>
    %98 = arith.select %96, %94, %97 : vector<8x512xi1>, vector<8x512xf32>
    %c15_i32_39 = arith.constant 15 : i32
    %99 = tpu.dynamic_rotate %87 by %c15_i32_39 dim 1 : vector<8x512xf32>, i32 -> vector<8x512xf32>
    %100 = arith.andi %10, %16 : vector<1x512xi1>
    %cst_40 = arith.constant 0.000000e+00 : f32
    %101 = vector.shape_cast %100 : vector<1x512xi1> to vector<1x512xi1>
    %102 = vector.broadcast %101 : vector<1x512xi1> to vector<8x512xi1>
    %103 = vector.broadcast %cst_40 : f32 to vector<8x512xf32>
    %104 = arith.select %102, %99, %103 : vector<8x512xi1>, vector<8x512xf32>
    %c1_i32_41 = arith.constant 1 : i32
    %105 = tpu.dynamic_rotate %87 by %c1_i32_41 dim 1 : vector<8x512xf32>, i32 -> vector<8x512xf32>
    %cst_42 = arith.constant 0.000000e+00 : f32
    %106 = vector.shape_cast %14 : vector<1x512xi1> to vector<1x512xi1>
    %107 = vector.broadcast %106 : vector<1x512xi1> to vector<8x512xi1>
    %108 = vector.broadcast %cst_42 : f32 to vector<8x512xf32>
    %109 = arith.select %107, %105, %108 : vector<8x512xi1>, vector<8x512xf32>
    %c511_i32_43 = arith.constant 511 : i32
    %110 = tpu.dynamic_rotate %87 by %c511_i32_43 dim 1 : vector<8x512xf32>, i32 -> vector<8x512xf32>
    %cst_44 = arith.constant 0.000000e+00 : f32
    %111 = vector.shape_cast %16 : vector<1x512xi1> to vector<1x512xi1>
    %112 = vector.broadcast %111 : vector<1x512xi1> to vector<8x512xi1>
    %113 = vector.broadcast %cst_44 : f32 to vector<8x512xf32>
    %114 = arith.select %112, %110, %113 : vector<8x512xi1>, vector<8x512xf32>
    %c497_i32_45 = arith.constant 497 : i32
    %115 = tpu.dynamic_rotate %87 by %c497_i32_45 dim 1 : vector<8x512xf32>, i32 -> vector<8x512xf32>
    %116 = arith.andi %12, %14 : vector<1x512xi1>
    %cst_46 = arith.constant 0.000000e+00 : f32
    %117 = vector.shape_cast %116 : vector<1x512xi1> to vector<1x512xi1>
    %118 = vector.broadcast %117 : vector<1x512xi1> to vector<8x512xi1>
    %119 = vector.broadcast %cst_46 : f32 to vector<8x512xf32>
    %120 = arith.select %118, %115, %119 : vector<8x512xi1>, vector<8x512xf32>
    %c496_i32_47 = arith.constant 496 : i32
    %121 = tpu.dynamic_rotate %87 by %c496_i32_47 dim 1 : vector<8x512xf32>, i32 -> vector<8x512xf32>
    %cst_48 = arith.constant 0.000000e+00 : f32
    %122 = vector.shape_cast %12 : vector<1x512xi1> to vector<1x512xi1>
    %123 = vector.broadcast %122 : vector<1x512xi1> to vector<8x512xi1>
    %124 = vector.broadcast %cst_48 : f32 to vector<8x512xf32>
    %125 = arith.select %123, %121, %124 : vector<8x512xi1>, vector<8x512xf32>
    %c495_i32_49 = arith.constant 495 : i32
    %126 = tpu.dynamic_rotate %87 by %c495_i32_49 dim 1 : vector<8x512xf32>, i32 -> vector<8x512xf32>
    %127 = arith.andi %12, %16 : vector<1x512xi1>
    %cst_50 = arith.constant 0.000000e+00 : f32
    %128 = vector.shape_cast %127 : vector<1x512xi1> to vector<1x512xi1>
    %129 = vector.broadcast %128 : vector<1x512xi1> to vector<8x512xi1>
    %130 = vector.broadcast %cst_50 : f32 to vector<8x512xf32>
    %131 = arith.select %129, %126, %130 : vector<8x512xi1>, vector<8x512xf32>
    %132 = tpu.concatenate %93, %98, %104, %109, %87, %114, %120, %125, %131 in 0 : vector<8x512xf32>, vector<8x512xf32>, vector<8x512xf32>, vector<8x512xf32>, vector<8x512xf32>, vector<8x512xf32>, vector<8x512xf32>, vector<8x512xf32>, vector<8x512xf32> -> vector<72x512xf32>
    %cst_51 = arith.constant dense<0.000000e+00> : vector<8x512xf32>
    %133 = tpu.matmul %2, %132, %cst_51 {dimension_numbers = #tpu.dot_dimension_numbers<[1], [0], [0], [1], [0, 0, 1, 1], [], []>} : vector<8x72xf32>, vector<72x512xf32>, vector<8x512xf32> -> vector<8x512xf32>
    %cst_52 = arith.constant dense<0.000000e+00> : vector<8xf32>
    %134 = vector.multi_reduction <add>, %133, %cst_52 [1] : vector<8x512xf32> to vector<8xf32>
    %135 = vector.shape_cast %134 : vector<8xf32> to vector<8x1xf32>
    %136 = arith.mulf %133, %133 : vector<8x512xf32>
    %cst_53 = arith.constant dense<0.000000e+00> : vector<8xf32>
    %137 = vector.multi_reduction <add>, %136, %cst_53 [1] : vector<8x512xf32> to vector<8xf32>
    %138 = vector.shape_cast %137 : vector<8xf32> to vector<8x1xf32>
    %cst_54 = arith.constant 0.001953125 : f32
    %139 = vector.broadcast %cst_54 : f32 to vector<8x1xf32>
    %140 = arith.mulf %135, %139 : vector<8x1xf32>
    %cst_55 = arith.constant 0.001953125 : f32
    %141 = vector.broadcast %cst_55 : f32 to vector<8x1xf32>
    %142 = arith.mulf %138, %141 : vector<8x1xf32>
    %143 = arith.mulf %140, %140 : vector<8x1xf32>
    %144 = arith.subf %142, %143 : vector<8x1xf32>
    %cst_56 = arith.constant 0.000000e+00 : f32
    %145 = vector.broadcast %cst_56 : f32 to vector<8x1xf32>
    %146 = arith.maximumf %144, %145 : vector<8x1xf32>
    %cst_57 = arith.constant 9.99999974E-6 : f32
    %147 = vector.broadcast %cst_57 : f32 to vector<8x1xf32>
    %148 = arith.addf %146, %147 : vector<8x1xf32>
    %149 = math.rsqrt %148 : vector<8x1xf32>
    %150 = arith.mulf %149, %5 : vector<8x1xf32>
    %151 = arith.mulf %140, %150 : vector<8x1xf32>
    %152 = arith.subf %6, %151 : vector<8x1xf32>
    %153 = vector.broadcast %150 : vector<8x1xf32> to vector<8x512xf32>
    %154 = arith.mulf %133, %153 : vector<8x512xf32>
    %155 = vector.broadcast %152 : vector<8x1xf32> to vector<8x512xf32>
    %156 = arith.addf %154, %155 : vector<8x512xf32>
    %157 = arith.addf %156, %0 : vector<8x512xf32>
    %cst_58 = arith.constant 0.000000e+00 : f32
    %158 = vector.broadcast %cst_58 : f32 to vector<8x512xf32>
    %159 = arith.maximumf %157, %158 : vector<8x512xf32>
    %c0_59 = arith.constant 0 : index
    %c0_60 = arith.constant 0 : index
    %160 = vector.load %arg10[%c0_59, %c0_60] : memref<8x512xf32, #tpu.memory_space<vmem>>, vector<8x512xf32>
    tpu.vector_store %arg10[%c0_59, %c0_60], %159 {strides = array<i32>} : memref<8x512xf32, #tpu.memory_space<vmem>>, vector<8x512xf32>,
    return
  }
  func.func @transform_0(%arg0: i32) -> (i32, i32) {
    %c0_i32 = arith.constant 0 : i32
    %c0_i32_0 = arith.constant 0 : i32
    %c0_i32_1 = arith.constant 0 : i32
    return %c0_i32, %c0_i32_0 : i32, i32
  }
  func.func @transform_1(%arg0: i32) -> (i32, i32) {
    %c0_i32 = arith.constant 0 : i32
    %c0_i32_0 = arith.constant 0 : i32
    %c0_i32_1 = arith.constant 0 : i32
    return %c0_i32, %c0_i32_0 : i32, i32
  }
  func.func @transform_2(%arg0: i32) -> (i32, i32) {
    %c0_i32 = arith.constant 0 : i32
    %c0_i32_0 = arith.constant 0 : i32
    %c0_i32_1 = arith.constant 0 : i32
    return %c0_i32, %c0_i32_0 : i32, i32
  }
  func.func @transform_3(%arg0: i32) -> (i32, i32) {
    %c0_i32 = arith.constant 0 : i32
    %c0_i32_0 = arith.constant 0 : i32
    %c0_i32_1 = arith.constant 0 : i32
    return %c0_i32, %c0_i32_0 : i32, i32
  }
  func.func @transform_4(%arg0: i32) -> (i32, i32) {
    %c0_i32 = arith.constant 0 : i32
    %c0_i32_0 = arith.constant 0 : i32
    %c0_i32_1 = arith.constant 0 : i32
    return %c0_i32, %c0_i32_0 : i32, i32
  }
  func.func @transform_5(%arg0: i32) -> (i32, i32) {
    %c0_i32 = arith.constant 0 : i32
    %c0_i32_0 = arith.constant 0 : i32
    %c0_i32_1 = arith.constant 0 : i32
    return %c0_i32, %c0_i32_0 : i32, i32
  }
  func.func @transform_6(%arg0: i32) -> (i32, i32) {
    %c0_i32 = arith.constant 0 : i32
    %c0_i32_0 = arith.constant 0 : i32
    %c0_i32_1 = arith.constant 0 : i32
    return %c0_i32, %c0_i32_0 : i32, i32
  }
  func.func @transform_7(%arg0: i32) -> (i32, i32) {
    %c0_i32 = arith.constant 0 : i32
    %c0_i32_0 = arith.constant 0 : i32
    %c0_i32_1 = arith.constant 0 : i32
    return %c0_i32, %c0_i32_0 : i32, i32
  }
  func.func @transform_8(%arg0: i32) -> (i32, i32) {
    %c0_i32 = arith.constant 0 : i32
    %c0_i32_0 = arith.constant 0 : i32
    %c0_i32_1 = arith.constant 0 : i32
    return %c0_i32, %c0_i32_0 : i32, i32
  }
  func.func @transform_9(%arg0: i32) -> (i32, i32) {
    %c0_i32 = arith.constant 0 : i32
    %c0_i32_0 = arith.constant 0 : i32
    %c0_i32_1 = arith.constant 0 : i32
    return %c0_i32, %c0_i32_0 : i32, i32
  }
}

</mosaic_0001>

<llo_original>
// kernel: tpu_custom_call.1
$region0: #{tpu_custom_call.1}
  #allocation0 [shape = 'u32[]', space=smem, size = 0x4, offset = 0x4, fixed_abs, tag = 'smem constant byte address 0x4 - core index']
  #allocation1 [shape = 'u32[144,128]{1,0:T(1,128)}', space=vmem, size = 0x12000, scoped, tag = 'internal scratch']
  %s0 = inlined_call_operand.vmem [shape: f32[8,512], index: 0, kind: input, shape index: {}]
  %s1 = inlined_call_operand.hbm [shape: s32[1,512], index: 1, kind: input, shape index: {}]
  %s2 = inlined_call_operand.hbm [shape: s32[1,512], index: 2, kind: input, shape index: {}]
  %s3 = inlined_call_operand.vmem [shape: f32[8,72], index: 3, kind: input, shape index: {}]
  %s4 = inlined_call_operand.vmem [shape: f32[8,1], index: 4, kind: input, shape index: {}]
  %s5 = inlined_call_operand.vmem [shape: f32[8,1], index: 5, kind: input, shape index: {}]
  %s6 = inlined_call_operand.vmem [shape: f32[8,72], index: 6, kind: input, shape index: {}]
  %s7 = inlined_call_operand.vmem [shape: f32[8,1], index: 7, kind: input, shape index: {}]
  %s8 = inlined_call_operand.vmem [shape: f32[8,1], index: 8, kind: input, shape index: {}]
  %s9 = inlined_call_operand.hbm [shape: f32[8,512], index: 9, kind: output, shape index: {}]
  %s10 = sld [smem:[#allocation0]]
  $region54: #{tpu_custom_call.1} parent=0
    _
  %s12 = ssub.s32 1, %s10
  %s13 = scalar_select 0, %s12, %s10
  $region1: #{tpu_custom_call.1} parent=0
    #allocation2 [shape = 'u8[2048]{0}', space=vmem, size = 0x800, scoped, tag = 'input window, operand 1, single buffered']
    #allocation3 [shape = 's32[1]{0}', space=sflag, size = 0x4, scoped, tag = 'scoped memory for tpu_custom_call.1']
    #allocation4 [shape = 's32[1]{0}', space=sflag, size = 0x4, scoped, tag = 'scoped memory for tpu_custom_call.1']
    #allocation5 [shape = 'u8[2048]{0}', space=vmem, size = 0x800, scoped, tag = 'input window, operand 2, single buffered']
    #allocation6 [shape = 's32[1]{0}', space=sflag, size = 0x4, scoped, tag = 'scoped memory for tpu_custom_call.1']
    #allocation7 [shape = 'u8[16384]{0}', space=vmem, size = 0x4000, scoped, tag = 'output window, operand 0, single buffered']
    %14 = vsyncpa [#allocation3], 0
    %15 = vsyncpa [#allocation6], 0
    %16 = vsyncpa [#allocation4], 0
    // Predicated region
    $region2: #{tpu_custom_call.1} parent=1 // pred_check
      _
    $region3: #{tpu_custom_call.1} parent=1 // pred_check_branch
      %18 = sbr.rel (0) target = $region5
    $region4: #{tpu_custom_call.1} parent=1 // pred_region
      _
    $region5: #{tpu_custom_call.1} parent=1 // pred_fallthru
      _
    // Predicated region
    $region6: #{tpu_custom_call.1} parent=1 // pred_check
      _
    $region7: #{tpu_custom_call.1} parent=1 // pred_check_branch
      %20 = sbr.rel (0) target = $region9
    $region8: #{tpu_custom_call.1} parent=1 // pred_region
      %s22 = ssub.s32 64, 64
      %23 = vsyncadd [#allocation3], %s22
      %s25 = sshll.u32 [#allocation2], 4
      %s26 = int_to_ptr.vmem [resolvable:$true] %s25
      %28 = dma.hbm_to_vmem [thread:$0]  %s1, 64, %s26, [#allocation3]
    $region9: #{tpu_custom_call.1} parent=1 // pred_fallthru
      _
    // Predicated region
    $region10: #{tpu_custom_call.1} parent=1 // pred_check
      _
    $region11: #{tpu_custom_call.1} parent=1 // pred_check_branch
      %30 = sbr.rel (0) target = $region13
    $region12: #{tpu_custom_call.1} parent=1 // pred_region
      %s32 = ssub.s32 64, 64
      %33 = vsyncadd [#allocation6], %s32
      %s35 = sshll.u32 [#allocation5], 4
      %s36 = int_to_ptr.vmem [resolvable:$true] %s35
      %38 = dma.hbm_to_vmem [thread:$0]  %s2, 64, %s36, [#allocation6]
    $region13: #{tpu_custom_call.1} parent=1 // pred_fallthru
      _
    // Predicated region
    $region14: #{tpu_custom_call.1} parent=1 // pred_check
      _
    $region15: #{tpu_custom_call.1} parent=1 // pred_check_branch
      %40 = sbr.rel (0) target = $region17
    $region16: #{tpu_custom_call.1} parent=1 // pred_region
      _
    $region17: #{tpu_custom_call.1} parent=1 // pred_fallthru
      _
    // Predicated region
    $region18: #{tpu_custom_call.1} parent=1 // pred_check
      _
    $region19: #{tpu_custom_call.1} parent=1 // pred_check_branch
      %42 = sbr.rel (0) target = $region21
    $region20: #{tpu_custom_call.1} parent=1 // pred_region
      _
    $region21: #{tpu_custom_call.1} parent=1 // pred_fallthru
      _
    // Predicated region
    $region22: #{tpu_custom_call.1} parent=1 // pred_check
      _
    $region23: #{tpu_custom_call.1} parent=1 // pred_check_branch
      %44 = sbr.rel (0) target = $region25
    $region24: #{tpu_custom_call.1} parent=1 // pred_region
      _
    $region25: #{tpu_custom_call.1} parent=1 // pred_fallthru
      _
    // Predicated region
    $region26: #{tpu_custom_call.1} parent=1 // pred_check
      _
    $region27: #{tpu_custom_call.1} parent=1 // pred_check_branch
      %46 = sbr.rel (0) target = $region29
    $region28: #{tpu_custom_call.1} parent=1 // pred_region
      _
    $region29: #{tpu_custom_call.1} parent=1 // pred_fallthru
      _
    // Predicated region
    $region30: #{tpu_custom_call.1} parent=1 // pred_check
      _
    $region31: #{tpu_custom_call.1} parent=1 // pred_check_branch
      %48 = sbr.rel (0) target = $region33
    $region32: #{tpu_custom_call.1} parent=1 // pred_region
      _
    $region33: #{tpu_custom_call.1} parent=1 // pred_fallthru
      _
    // Predicated region
    $region34: #{tpu_custom_call.1} parent=1 // pred_check
      _
    $region35: #{tpu_custom_call.1} parent=1 // pred_check_branch
      %50 = sbr.rel (0) target = $region37
    $region36: #{tpu_custom_call.1} parent=1 // pred_region
      _
    $region37: #{tpu_custom_call.1} parent=1 // pred_fallthru
      _
    // Predicated region
    $region38: #{tpu_custom_call.1} parent=1 // pred_check
      _
    $region39: #{tpu_custom_call.1} parent=1 // pred_check_branch
      %52 = sbr.rel (0) target = $region41
    $region40: #{tpu_custom_call.1} parent=1 // pred_region
      %53 = dma.done [#allocation3], 64
    $region41: #{tpu_custom_call.1} parent=1 // pred_fallthru
      _
    // Predicated region
    $region42: #{tpu_custom_call.1} parent=1 // pred_check
      _
    $region43: #{tpu_custom_call.1} parent=1 // pred_check_branch
      %55 = sbr.rel (0) target = $region45
    $region44: #{tpu_custom_call.1} parent=1 // pred_region
      %56 = dma.done [#allocation6], 64
    $region45: #{tpu_custom_call.1} parent=1 // pred_fallthru
      _
    %v57 = vld [vmem:[%s0] sm:$0xff]
    %v58 = vld [vmem:[%s0 + $0x8] sm:$0xff]
    %v59 = vld [vmem:[%s0 + $0x10] sm:$0xff]
    %v60 = vld [vmem:[%s0 + $0x18] sm:$0xff]
    %v61 = vld [vmem:[%s3] sm:$0xff]
    %v62 = vld [vmem:[%s6] sm:$0xff]
    %v63 = vld [vmem:[%s4] sm:$0xff]
    %v64 = vld [vmem:[%s5] sm:$0xff]
    %v65 = vld [vmem:[%s7] sm:$0xff]
    %v66 = vld [vmem:[%s8] sm:$0xff]
    %v67 = vld [vmem:[#allocation2] sm:$0xf]
    %v68 = vld [vmem:[#allocation5] sm:$0xf]
    %vm69 = vcmp.ge.s32.totalorder %v67, 1
    %vm70 = vcmp.le.s32.totalorder %v67, 14
    %vm71 = vcmp.ge.s32.totalorder %v68, 1
    %vm72 = vcmp.le.s32.totalorder %v68, 14
    %73 = vrot.lane.b32.xlu0 %v57, 17
    %v74 = vpop.permute.xlu0 %73
    %75 = vrot.lane.b32.xlu0 %v58, 17
    %v76 = vpop.permute.xlu0 %75
    %77 = vrot.lane.b32.xlu0 %v59, 17
    %v78 = vpop.permute.xlu0 %77
    %79 = vrot.lane.b32.xlu0 %v60, 17
    %v80 = vpop.permute.xlu0 %79
    %v81 = vlaneseq
    %v82 = vand.u32 %v81, 127
    %vm83 = vcmp.lt.s32.totalorder %v82, 17
    %v84 = vsel %vm83, %v78, %v80
    %v85 = vsel %vm83, %v76, %v78
    %v86 = vsel %vm83, %v74, %v76
    %v87 = vsel %vm83, %v80, %v74
    %vm88 = vmand %vm69, %vm71
    %v89 = vsel %vm88, 1, 0
    %v90 = vlaneseq
    %v91 = vshrl.u32 %v90, 7
    %v92 = vsub.s32 0, %v91
    %v93 = vrot.slane %v89, %v92
    %v94 = vlaneseq
    %v95 = vshrl.u32 %v94, 7
    %v96 = vsub.s32 1, %v95
    %v97 = vrot.slane %v89, %v96
    %v98 = vlaneseq
    %v99 = vshrl.u32 %v98, 7
    %v100 = vsub.s32 2, %v99
    %v101 = vrot.slane %v89, %v100
    %v102 = vlaneseq
    %v103 = vshrl.u32 %v102, 7
    %v104 = vsub.s32 3, %v103
    %v105 = vrot.slane %v89, %v104
    %vm106 = vcmp.eq.s32.totalorder %v93, 1
    %vm107 = vcmp.eq.s32.totalorder %v97, 1
    %vm108 = vcmp.eq.s32.totalorder %v101, 1
    %vm109 = vcmp.eq.s32.totalorder %v105, 1
    %v110 = vsel %vm106, %v87, 0.0
    %v111 = vsel %vm107, %v86, 0.0
    %v112 = vsel %vm108, %v85, 0.0
    %v113 = vsel %vm109, %v84, 0.0
    %114 = vrot.lane.b32.xlu0 %v57, 16
    %v115 = vpop.permute.xlu0 %114
    %116 = vrot.lane.b32.xlu0 %v58, 16
    %v117 = vpop.permute.xlu0 %116
    %118 = vrot.lane.b32.xlu0 %v59, 16
    %v119 = vpop.permute.xlu0 %118
    %120 = vrot.lane.b32.xlu0 %v60, 16
    %v121 = vpop.permute.xlu0 %120
    %vm122 = vcmp.lt.s32.totalorder %v82, 16
    %v123 = vsel %vm122, %v119, %v121
    %v124 = vsel %vm122, %v117, %v119
    %v125 = vsel %vm122, %v115, %v117
    %v126 = vsel %vm122, %v121, %v115
    %v127 = vsel %vm69, 1, 0
    %v128 = vlaneseq
    %v129 = vshrl.u32 %v128, 7
    %v130 = vsub.s32 0, %v129
    %v131 = vrot.slane %v127, %v130
    %v132 = vlaneseq
    %v133 = vshrl.u32 %v132, 7
    %v134 = vsub.s32 1, %v133
    %v135 = vrot.slane %v127, %v134
    %v136 = vlaneseq
    %v137 = vshrl.u32 %v136, 7
    %v138 = vsub.s32 2, %v137
    %v139 = vrot.slane %v127, %v138
    %v140 = vlaneseq
    %v141 = vshrl.u32 %v140, 7
    %v142 = vsub.s32 3, %v141
    %v143 = vrot.slane %v127, %v142
    %vm144 = vcmp.eq.s32.totalorder %v131, 1
    %vm145 = vcmp.eq.s32.totalorder %v135, 1
    %vm146 = vcmp.eq.s32.totalorder %v139, 1
    %vm147 = vcmp.eq.s32.totalorder %v143, 1
    %v148 = vsel %vm144, %v126, 0.0
    %v149 = vsel %vm145, %v125, 0.0
    %v150 = vsel %vm146, %v124, 0.0
    %v151 = vsel %vm147, %v123, 0.0
    %152 = vrot.lane.b32.xlu0 %v57, 15
    %v153 = vpop.permute.xlu0 %152
    %154 = vrot.lane.b32.xlu0 %v58, 15
    %v155 = vpop.permute.xlu0 %154
    %156 = vrot.lane.b32.xlu0 %v59, 15
    %v157 = vpop.permute.xlu0 %156
    %158 = vrot.lane.b32.xlu0 %v60, 15
    %v159 = vpop.permute.xlu0 %158
    %vm160 = vcmp.lt.s32.totalorder %v82, 15
    %v161 = vsel %vm160, %v157, %v159
    %v162 = vsel %vm160, %v155, %v157
    %v163 = vsel %vm160, %v153, %v155
    %v164 = vsel %vm160, %v159, %v153
    %vm165 = vmand %vm69, %vm72
    %v166 = vsel %vm165, 1, 0
    %v167 = vlaneseq
    %v168 = vshrl.u32 %v167, 7
    %v169 = vsub.s32 0, %v168
    %v170 = vrot.slane %v166, %v169
    %v171 = vlaneseq
    %v172 = vshrl.u32 %v171, 7
    %v173 = vsub.s32 1, %v172
    %v174 = vrot.slane %v166, %v173
    %v175 = vlaneseq
    %v176 = vshrl.u32 %v175, 7
    %v177 = vsub.s32 2, %v176
    %v178 = vrot.slane %v166, %v177
    %v179 = vlaneseq
    %v180 = vshrl.u32 %v179, 7
    %v181 = vsub.s32 3, %v180
    %v182 = vrot.slane %v166, %v181
    %vm183 = vcmp.eq.s32.totalorder %v170, 1
    %vm184 = vcmp.eq.s32.totalorder %v174, 1
    %vm185 = vcmp.eq.s32.totalorder %v178, 1
    %vm186 = vcmp.eq.s32.totalorder %v182, 1
    %v187 = vsel %vm183, %v164, 0.0
    %v188 = vsel %vm184, %v163, 0.0
    %v189 = vsel %vm185, %v162, 0.0
    %v190 = vsel %vm186, %v161, 0.0
    %191 = vrot.lane.b32.xlu0 %v57, 1
    %v192 = vpop.permute.xlu0 %191
    %193 = vrot.lane.b32.xlu0 %v58, 1
    %v194 = vpop.permute.xlu0 %193
    %195 = vrot.lane.b32.xlu0 %v59, 1
    %v196 = vpop.permute.xlu0 %195
    %197 = vrot.lane.b32.xlu0 %v60, 1
    %v198 = vpop.permute.xlu0 %197
    %vm199 = vcmp.lt.s32.totalorder %v82, 1
    %v200 = vsel %vm199, %v196, %v198
    %v201 = vsel %vm199, %v194, %v196
    %v202 = vsel %vm199, %v192, %v194
    %v203 = vsel %vm199, %v198, %v192
    %v204 = vsel %vm71, 1, 0
    %v205 = vlaneseq
    %v206 = vshrl.u32 %v205, 7
    %v207 = vsub.s32 0, %v206
    %v208 = vrot.slane %v204, %v207
    %v209 = vlaneseq
    %v210 = vshrl.u32 %v209, 7
    %v211 = vsub.s32 1, %v210
    %v212 = vrot.slane %v204, %v211
    %v213 = vlaneseq
    %v214 = vshrl.u32 %v213, 7
    %v215 = vsub.s32 2, %v214
    %v216 = vrot.slane %v204, %v215
    %v217 = vlaneseq
    %v218 = vshrl.u32 %v217, 7
    %v219 = vsub.s32 3, %v218
    %v220 = vrot.slane %v204, %v219
    %vm221 = vcmp.eq.s32.totalorder %v208, 1
    %vm222 = vcmp.eq.s32.totalorder %v212, 1
    %vm223 = vcmp.eq.s32.totalorder %v216, 1
    %vm224 = vcmp.eq.s32.totalorder %v220, 1
    %v225 = vsel %vm221, %v203, 0.0
    %v226 = vsel %vm222, %v202, 0.0
    %v227 = vsel %vm223, %v201, 0.0
    %v228 = vsel %vm224, %v200, 0.0
    %229 = vrot.lane.b32.xlu0 %v57, 127
    %v230 = vpop.permute.xlu0 %229
    %231 = vrot.lane.b32.xlu0 %v58, 127
    %v232 = vpop.permute.xlu0 %231
    %233 = vrot.lane.b32.xlu0 %v59, 127
    %v234 = vpop.permute.xlu0 %233
    %235 = vrot.lane.b32.xlu0 %v60, 127
    %v236 = vpop.permute.xlu0 %235
    %vm237 = vcmp.lt.s32.totalorder %v82, 127
    %v238 = vsel %vm237, %v234, %v236
    %v239 = vsel %vm237, %v232, %v234
    %v240 = vsel %vm237, %v230, %v232
    %v241 = vsel %vm237, %v236, %v230
    %v242 = vsel %vm72, 1, 0
    %v243 = vlaneseq
    %v244 = vshrl.u32 %v243, 7
    %v245 = vsub.s32 0, %v244
    %v246 = vrot.slane %v242, %v245
    %v247 = vlaneseq
    %v248 = vshrl.u32 %v247, 7
    %v249 = vsub.s32 1, %v248
    %v250 = vrot.slane %v242, %v249
    %v251 = vlaneseq
    %v252 = vshrl.u32 %v251, 7
    %v253 = vsub.s32 2, %v252
    %v254 = vrot.slane %v242, %v253
    %v255 = vlaneseq
    %v256 = vshrl.u32 %v255, 7
    %v257 = vsub.s32 3, %v256
    %v258 = vrot.slane %v242, %v257
    %vm259 = vcmp.eq.s32.totalorder %v246, 1
    %vm260 = vcmp.eq.s32.totalorder %v250, 1
    %vm261 = vcmp.eq.s32.totalorder %v254, 1
    %vm262 = vcmp.eq.s32.totalorder %v258, 1
    %v263 = vsel %vm259, %v240, 0.0
    %v264 = vsel %vm260, %v239, 0.0
    %v265 = vsel %vm261, %v238, 0.0
    %v266 = vsel %vm262, %v241, 0.0
    %267 = vrot.lane.b32.xlu0 %v57, 113
    %v268 = vpop.permute.xlu0 %267
    %269 = vrot.lane.b32.xlu0 %v58, 113
    %v270 = vpop.permute.xlu0 %269
    %271 = vrot.lane.b32.xlu0 %v59, 113
    %v272 = vpop.permute.xlu0 %271
    %273 = vrot.lane.b32.xlu0 %v60, 113
    %v274 = vpop.permute.xlu0 %273
    %vm275 = vcmp.lt.s32.totalorder %v82, 113
    %v276 = vsel %vm275, %v272, %v274
    %v277 = vsel %vm275, %v270, %v272
    %v278 = vsel %vm275, %v268, %v270
    %v279 = vsel %vm275, %v274, %v268
    %vm280 = vmand %vm70, %vm71
    %v281 = vsel %vm280, 1, 0
    %v282 = vlaneseq
    %v283 = vshrl.u32 %v282, 7
    %v284 = vsub.s32 0, %v283
    %v285 = vrot.slane %v281, %v284
    %v286 = vlaneseq
    %v287 = vshrl.u32 %v286, 7
    %v288 = vsub.s32 1, %v287
    %v289 = vrot.slane %v281, %v288
    %v290 = vlaneseq
    %v291 = vshrl.u32 %v290, 7
    %v292 = vsub.s32 2, %v291
    %v293 = vrot.slane %v281, %v292
    %v294 = vlaneseq
    %v295 = vshrl.u32 %v294, 7
    %v296 = vsub.s32 3, %v295
    %v297 = vrot.slane %v281, %v296
    %vm298 = vcmp.eq.s32.totalorder %v285, 1
    %vm299 = vcmp.eq.s32.totalorder %v289, 1
    %vm300 = vcmp.eq.s32.totalorder %v293, 1
    %vm301 = vcmp.eq.s32.totalorder %v297, 1
    %v302 = vsel %vm298, %v278, 0.0
    %v303 = vsel %vm299, %v277, 0.0
    %v304 = vsel %vm300, %v276, 0.0
    %v305 = vsel %vm301, %v279, 0.0
    %306 = vrot.lane.b32.xlu0 %v57, 112
    %v307 = vpop.permute.xlu0 %306
    %308 = vrot.lane.b32.xlu0 %v58, 112
    %v309 = vpop.permute.xlu0 %308
    %310 = vrot.lane.b32.xlu0 %v59, 112
    %v311 = vpop.permute.xlu0 %310
    %312 = vrot.lane.b32.xlu0 %v60, 112
    %v313 = vpop.permute.xlu0 %312
    %vm314 = vcmp.lt.s32.totalorder %v82, 112
    %v315 = vsel %vm314, %v311, %v313
    %v316 = vsel %vm314, %v309, %v311
    %v317 = vsel %vm314, %v307, %v309
    %v318 = vsel %vm314, %v313, %v307
    %v319 = vsel %vm70, 1, 0
    %v320 = vlaneseq
    %v321 = vshrl.u32 %v320, 7
    %v322 = vsub.s32 0, %v321
    %v323 = vrot.slane %v319, %v322
    %v324 = vlaneseq
    %v325 = vshrl.u32 %v324, 7
    %v326 = vsub.s32 1, %v325
    %v327 = vrot.slane %v319, %v326
    %v328 = vlaneseq
    %v329 = vshrl.u32 %v328, 7
    %v330 = vsub.s32 2, %v329
    %v331 = vrot.slane %v319, %v330
    %v332 = vlaneseq
    %v333 = vshrl.u32 %v332, 7
    %v334 = vsub.s32 3, %v333
    %v335 = vrot.slane %v319, %v334
    %vm336 = vcmp.eq.s32.totalorder %v323, 1
    %vm337 = vcmp.eq.s32.totalorder %v327, 1
    %vm338 = vcmp.eq.s32.totalorder %v331, 1
    %vm339 = vcmp.eq.s32.totalorder %v335, 1
    %v340 = vsel %vm336, %v317, 0.0
    %v341 = vsel %vm337, %v316, 0.0
    %v342 = vsel %vm338, %v315, 0.0
    %v343 = vsel %vm339, %v318, 0.0
    %344 = vrot.lane.b32.xlu0 %v57, 111
    %v345 = vpop.permute.xlu0 %344
    %346 = vrot.lane.b32.xlu0 %v58, 111
    %v347 = vpop.permute.xlu0 %346
    %348 = vrot.lane.b32.xlu0 %v59, 111
    %v349 = vpop.permute.xlu0 %348
    %350 = vrot.lane.b32.xlu0 %v60, 111
    %v351 = vpop.permute.xlu0 %350
    %vm352 = vcmp.lt.s32.totalorder %v82, 111
    %v353 = vsel %vm352, %v349, %v351
    %v354 = vsel %vm352, %v347, %v349
    %v355 = vsel %vm352, %v345, %v347
    %v356 = vsel %vm352, %v351, %v345
    %vm357 = vmand %vm70, %vm72
    %v358 = vsel %vm357, 1, 0
    %v359 = vlaneseq
    %v360 = vshrl.u32 %v359, 7
    %v361 = vsub.s32 0, %v360
    %v362 = vrot.slane %v358, %v361
    %v363 = vlaneseq
    %v364 = vshrl.u32 %v363, 7
    %v365 = vsub.s32 1, %v364
    %v366 = vrot.slane %v358, %v365
    %v367 = vlaneseq
    %v368 = vshrl.u32 %v367, 7
    %v369 = vsub.s32 2, %v368
    %v370 = vrot.slane %v358, %v369
    %v371 = vlaneseq
    %v372 = vshrl.u32 %v371, 7
    %v373 = vsub.s32 3, %v372
    %v374 = vrot.slane %v358, %v373
    %vm375 = vcmp.eq.s32.totalorder %v362, 1
    %vm376 = vcmp.eq.s32.totalorder %v366, 1
    %vm377 = vcmp.eq.s32.totalorder %v370, 1
    %vm378 = vcmp.eq.s32.totalorder %v374, 1
    %v379 = vsel %vm375, %v355, 0.0
    %v380 = vsel %vm376, %v354, 0.0
    %v381 = vsel %vm377, %v353, 0.0
    %v382 = vsel %vm378, %v356, 0.0
    %vm383 = vcmask 588800
    %v385 = vsel %vm383, %v61, 0
    %387 = vmatprep.subr.mxu0 %v111
    %388 = vmatpush1.msra.mxu0 %v110
    %389 = vmatprep.subr.mxu0 %v149
    %390 = vmatpush1.msra.mxu0 %v148
    %391 = vmatprep.subr.mxu0 %v188
    %392 = vmatpush1.msra.mxu0 %v187
    %393 = vmatprep.subr.mxu0 %v226
    %394 = vmatpush1.msra.mxu0 %v225
    %395 = vmatprep.subr.mxu0 %v58
    %396 = vmatpush1.msra.mxu0 %v57
    %397 = vmatprep.subr.mxu0 %v264
    %398 = vmatpush1.msra.mxu0 %v263
    %399 = vmatprep.subr.mxu0 %v303
    %400 = vmatpush1.msra.mxu0 %v302
    %401 = vmatprep.subr.mxu0 %v341
    %402 = vmatpush1.msra.mxu0 %v340
    %403 = vmatprep.subr.mxu0 %v380
    %404 = vmatpush1.msra.mxu0 %v379
    %405 = vmatprep.subr.mxu0 0.0
    %406 = vmatpush1.msra.mxu0 0.0
    %407 = vmatprep.subr.mxu0 0.0
    %408 = vmatpush1.msra.mxu0 0.0
    %409 = vmatprep.subr.mxu0 0.0
    %410 = vmatpush1.msra.mxu0 0.0
    %411 = vmatprep.subr.mxu0 0.0
    %412 = vmatpush1.msra.mxu0 0.0
    %413 = vmatprep.subr.mxu0 0.0
    %414 = vmatpush1.msra.mxu0 0.0
    %415 = vmatprep.subr.mxu0 0.0
    %416 = vmatpush1.msra.mxu0 0.0
    %417 = vmatprep.subr.mxu0 0.0
    %418 = vmatpush1.msra.mxu0 0.0
    %419 = vmatprep.subr.mxu0 0.0
    %420 = vmatpush1.msra.mxu0 0.0
    %421 = vmatprep.subr.mxu0 0.0
    %422 = vmatpush1.msra.mxu0 0.0
    %423 = vmatprep.subr.mxu0 0.0
    %424 = vmatpush1.msra.mxu0 0.0
    %425 = vmatprep.subr.mxu0 0.0
    %426 = vmatpush1.msra.mxu0 0.0
    %427 = vmatprep.subr.mxu0 0.0
    %428 = vmatpush1.msra.mxu0 0.0
    %429 = vmatprep.subr.mxu0 0.0
    %430 = vmatpush1.msra.mxu0 0.0
    %431 = vmatprep.subr.mxu0 0.0
    %432 = vmatpush1.msra.mxu0 0.0
    %433 = vmatprep.subr.mxu0 0.0
    %434 = vmatpush1.msra.mxu0 0.0
    %435 = vmatprep.subr.mxu0 0.0
    %436 = vmatpush1.msra.mxu0 0.0
    %437 = vmatprep.subr.mxu0 0.0
    %438 = vmatpush1.msra.mxu0 0.0
    %439 = vmatprep.subr.mxu0 0.0
    %440 = vmatpush1.msra.mxu0 0.0
    %441 = vmatprep.subr.mxu0 0.0
    %442 = vmatpush1.msra.mxu0 0.0
    %443 = vmatprep.subr.mxu0 0.0
    %444 = vmatpush1.msra.mxu0 0.0
    %445 = vmatprep.subr.mxu0 0.0
    %446 = vmatpush1.msra.mxu0 0.0
    %447 = vmatprep.subr.mxu0 0.0
    %448 = vmatpush1.msra.mxu0 0.0
    %449 = vmatprep.subr.mxu0 0.0
    %450 = vmatpush1.msra.mxu0 0.0
    %451 = vmatprep.mubr.f32.mxu0 0.0
    %452 = vmatmul.mubr.f32.gmra.mrb[0].mxu0 %v385
    %v453 = vpop.f32.mrb[0].mxu0
    %v454 = vadd.f32 0.0, %v453
    %v455 = vpop.f32.mrb[0].mxu0
    %v456 = vadd.f32 0.0, %v455
    %457 = vdwg.mxu0
    %458 = vmatprep.subr.mxu0 %v113
    %459 = vmatpush1.msra.mxu0 %v112
    %460 = vmatprep.subr.mxu0 %v151
    %461 = vmatpush1.msra.mxu0 %v150
    %462 = vmatprep.subr.mxu0 %v190
    %463 = vmatpush1.msra.mxu0 %v189
    %464 = vmatprep.subr.mxu0 %v228
    %465 = vmatpush1.msra.mxu0 %v227
    %466 = vmatprep.subr.mxu0 %v60
    %467 = vmatpush1.msra.mxu0 %v59
    %468 = vmatprep.subr.mxu0 %v266
    %469 = vmatpush1.msra.mxu0 %v265
    %470 = vmatprep.subr.mxu0 %v305
    %471 = vmatpush1.msra.mxu0 %v304
    %472 = vmatprep.subr.mxu0 %v343
    %473 = vmatpush1.msra.mxu0 %v342
    %474 = vmatprep.subr.mxu0 %v382
    %475 = vmatpush1.msra.mxu0 %v381
    %476 = vmatprep.subr.mxu0 0.0
    %477 = vmatpush1.msra.mxu0 0.0
    %478 = vmatprep.subr.mxu0 0.0
    %479 = vmatpush1.msra.mxu0 0.0
    %480 = vmatprep.subr.mxu0 0.0
    %481 = vmatpush1.msra.mxu0 0.0
    %482 = vmatprep.subr.mxu0 0.0
    %483 = vmatpush1.msra.mxu0 0.0
    %484 = vmatprep.subr.mxu0 0.0
    %485 = vmatpush1.msra.mxu0 0.0
    %486 = vmatprep.subr.mxu0 0.0
    %487 = vmatpush1.msra.mxu0 0.0
    %488 = vmatprep.subr.mxu0 0.0
    %489 = vmatpush1.msra.mxu0 0.0
    %490 = vmatprep.subr.mxu0 0.0
    %491 = vmatpush1.msra.mxu0 0.0
    %492 = vmatprep.subr.mxu0 0.0
    %493 = vmatpush1.msra.mxu0 0.0
    %494 = vmatprep.subr.mxu0 0.0
    %495 = vmatpush1.msra.mxu0 0.0
    %496 = vmatprep.subr.mxu0 0.0
    %497 = vmatpush1.msra.mxu0 0.0
    %498 = vmatprep.subr.mxu0 0.0
    %499 = vmatpush1.msra.mxu0 0.0
    %500 = vmatprep.subr.mxu0 0.0
    %501 = vmatpush1.msra.mxu0 0.0
    %502 = vmatprep.subr.mxu0 0.0
    %503 = vmatpush1.msra.mxu0 0.0
    %504 = vmatprep.subr.mxu0 0.0
    %505 = vmatpush1.msra.mxu0 0.0
    %506 = vmatprep.subr.mxu0 0.0
    %507 = vmatpush1.msra.mxu0 0.0
    %508 = vmatprep.subr.mxu0 0.0
    %509 = vmatpush1.msra.mxu0 0.0
    %510 = vmatprep.subr.mxu0 0.0
    %511 = vmatpush1.msra.mxu0 0.0
    %512 = vmatprep.subr.mxu0 0.0
    %513 = vmatpush1.msra.mxu0 0.0
    %514 = vmatprep.subr.mxu0 0.0
    %515 = vmatpush1.msra.mxu0 0.0
    %516 = vmatprep.subr.mxu0 0.0
    %517 = vmatpush1.msra.mxu0 0.0
    %518 = vmatprep.subr.mxu0 0.0
    %519 = vmatpush1.msra.mxu0 0.0
    %520 = vmatprep.subr.mxu0 0.0
    %521 = vmatpush1.msra.mxu0 0.0
    %522 = vmatprep.mubr.f32.mxu0 0.0
    %523 = vmatmul.mubr.f32.gmra.mrb[0].mxu0 %v385
    %v524 = vpop.f32.mrb[0].mxu0
    %v525 = vadd.f32 0.0, %v524
    %v526 = vpop.f32.mrb[0].mxu0
    %v527 = vadd.f32 0.0, %v526
    %528 = vdwg.mxu0
    %v529 = vadd.f32 %v454, %v456
    %v530 = vadd.f32 %v529, %v525
    %v531 = vadd.f32 %v530, %v527
    %532 = vadd.xlane.f32.xlu0 %v531
    %v533 = vpop.xlane.xlu0 %532
    %v534 = vmul.f32 %v454, %v454
    %v535 = vmul.f32 %v456, %v456
    %v536 = vmul.f32 %v525, %v525
    %v537 = vmul.f32 %v527, %v527
    %v538 = vadd.f32 %v534, %v535
    %v539 = vadd.f32 %v538, %v536
    %v540 = vadd.f32 %v539, %v537
    %541 = vadd.xlane.f32.xlu0 %v540
    %v542 = vpop.xlane.xlu0 %541
    %v543 = vmul.f32 %v533, 0.001953125
    %v544 = vmul.f32 %v542, 0.001953125
    %v545 = vmul.f32 %v543, %v543
    %v546 = vsub.f32 %v544, %v545
    %v547 = vmax.f32 %v546, 0.0
    %v548 = vadd.f32 %v547, 1e-05
    %v549 = vrsqrt.pop %v548
    %v550 = vmul.f32 %v549, %v63
    %v551 = vmul.f32 %v543, %v550
    %v552 = vsub.f32 %v64, %v551
    %554 = vset.pattern.permute.xlu0 0
    %555 = vperm.xlu0 %554, %v550
    %v556 = vpop.permute.xlu0 %555
    %v558 = vmul.f32 %v454, %v556
    %v559 = vmul.f32 %v456, %v556
    %v560 = vmul.f32 %v525, %v556
    %v561 = vmul.f32 %v527, %v556
    %563 = vset.pattern.permute.xlu0 0
    %564 = vperm.xlu0 %563, %v552
    %v565 = vpop.permute.xlu0 %564
    %v567 = vadd.f32 %v558, %v565
    %v568 = vadd.f32 %v559, %v565
    %v569 = vadd.f32 %v560, %v565
    %v570 = vadd.f32 %v561, %v565
    %v571 = vmax.f32 %v567, 0.0
    %v572 = vmax.f32 %v568, 0.0
    %v573 = vmax.f32 %v569, 0.0
    %v574 = vmax.f32 %v570, 0.0
    %575 = vrot.lane.b32.xlu0 %v571, 17
    %v576 = vpop.permute.xlu0 %575
    %577 = vrot.lane.b32.xlu0 %v572, 17
    %v578 = vpop.permute.xlu0 %577
    %579 = vrot.lane.b32.xlu0 %v573, 17
    %v580 = vpop.permute.xlu0 %579
    %581 = vrot.lane.b32.xlu0 %v574, 17
    %v582 = vpop.permute.xlu0 %581
    %v583 = vsel %vm83, %v580, %v582
    %v584 = vsel %vm83, %v578, %v580
    %v585 = vsel %vm83, %v576, %v578
    %v586 = vsel %vm83, %v582, %v576
    %v587 = vsel %vm106, %v586, 0.0
    %v588 = vsel %vm107, %v585, 0.0
    %v589 = vsel %vm108, %v584, 0.0
    %v590 = vsel %vm109, %v583, 0.0
    %591 = vrot.lane.b32.xlu0 %v571, 16
    %v592 = vpop.permute.xlu0 %591
    %593 = vrot.lane.b32.xlu0 %v572, 16
    %v594 = vpop.permute.xlu0 %593
    %595 = vrot.lane.b32.xlu0 %v573, 16
    %v596 = vpop.permute.xlu0 %595
    %597 = vrot.lane.b32.xlu0 %v574, 16
    %v598 = vpop.permute.xlu0 %597
    %v599 = vsel %vm122, %v596, %v598
    %v600 = vsel %vm122, %v594, %v596
    %v601 = vsel %vm122, %v592, %v594
    %v602 = vsel %vm122, %v598, %v592
    %v603 = vsel %vm144, %v602, 0.0
    %v604 = vsel %vm145, %v601, 0.0
    %v605 = vsel %vm146, %v600, 0.0
    %v606 = vsel %vm147, %v599, 0.0
    %607 = vrot.lane.b32.xlu0 %v571, 15
    %v608 = vpop.permute.xlu0 %607
    %609 = vrot.lane.b32.xlu0 %v572, 15
    %v610 = vpop.permute.xlu0 %609
    %611 = vrot.lane.b32.xlu0 %v573, 15
    %v612 = vpop.permute.xlu0 %611
    %613 = vrot.lane.b32.xlu0 %v574, 15
    %v614 = vpop.permute.xlu0 %613
    %v615 = vsel %vm160, %v612, %v614
    %v616 = vsel %vm160, %v610, %v612
    %v617 = vsel %vm160, %v608, %v610
    %v618 = vsel %vm160, %v614, %v608
    %v619 = vsel %vm183, %v618, 0.0
    %v620 = vsel %vm184, %v617, 0.0
    %v621 = vsel %vm185, %v616, 0.0
    %v622 = vsel %vm186, %v615, 0.0
    %623 = vrot.lane.b32.xlu0 %v571, 1
    %v624 = vpop.permute.xlu0 %623
    %625 = vrot.lane.b32.xlu0 %v572, 1
    %v626 = vpop.permute.xlu0 %625
    %627 = vrot.lane.b32.xlu0 %v573, 1
    %v628 = vpop.permute.xlu0 %627
    %629 = vrot.lane.b32.xlu0 %v574, 1
    %v630 = vpop.permute.xlu0 %629
    %v631 = vsel %vm199, %v628, %v630
    %v632 = vsel %vm199, %v626, %v628
    %v633 = vsel %vm199, %v624, %v626
    %v634 = vsel %vm199, %v630, %v624
    %v635 = vsel %vm221, %v634, 0.0
    %v636 = vsel %vm222, %v633, 0.0
    %v637 = vsel %vm223, %v632, 0.0
    %v638 = vsel %vm224, %v631, 0.0
    %639 = vrot.lane.b32.xlu0 %v571, 127
    %v640 = vpop.permute.xlu0 %639
    %641 = vrot.lane.b32.xlu0 %v572, 127
    %v642 = vpop.permute.xlu0 %641
    %643 = vrot.lane.b32.xlu0 %v573, 127
    %v644 = vpop.permute.xlu0 %643
    %645 = vrot.lane.b32.xlu0 %v574, 127
    %v646 = vpop.permute.xlu0 %645
    %v647 = vsel %vm237, %v644, %v646
    %v648 = vsel %vm237, %v642, %v644
    %v649 = vsel %vm237, %v640, %v642
    %v650 = vsel %vm237, %v646, %v640
    %v651 = vsel %vm259, %v649, 0.0
    %v652 = vsel %vm260, %v648, 0.0
    %v653 = vsel %vm261, %v647, 0.0
    %v654 = vsel %vm262, %v650, 0.0
    %655 = vrot.lane.b32.xlu0 %v571, 113
    %v656 = vpop.permute.xlu0 %655
    %657 = vrot.lane.b32.xlu0 %v572, 113
    %v658 = vpop.permute.xlu0 %657
    %659 = vrot.lane.b32.xlu0 %v573, 113
    %v660 = vpop.permute.xlu0 %659
    %661 = vrot.lane.b32.xlu0 %v574, 113
    %v662 = vpop.permute.xlu0 %661
    %v663 = vsel %vm275, %v660, %v662
    %v664 = vsel %vm275, %v658, %v660
    %v665 = vsel %vm275, %v656, %v658
    %v666 = vsel %vm275, %v662, %v656
    %v667 = vsel %vm298, %v665, 0.0
    %v668 = vsel %vm299, %v664, 0.0
    %v669 = vsel %vm300, %v663, 0.0
    %v670 = vsel %vm301, %v666, 0.0
    %671 = vrot.lane.b32.xlu0 %v571, 112
    %v672 = vpop.permute.xlu0 %671
    %673 = vrot.lane.b32.xlu0 %v572, 112
    %v674 = vpop.permute.xlu0 %673
    %675 = vrot.lane.b32.xlu0 %v573, 112
    %v676 = vpop.permute.xlu0 %675
    %677 = vrot.lane.b32.xlu0 %v574, 112
    %v678 = vpop.permute.xlu0 %677
    %v679 = vsel %vm314, %v676, %v678
    %v680 = vsel %vm314, %v674, %v676
    %v681 = vsel %vm314, %v672, %v674
    %v682 = vsel %vm314, %v678, %v672
    %v683 = vsel %vm336, %v681, 0.0
    %v684 = vsel %vm337, %v680, 0.0
    %v685 = vsel %vm338, %v679, 0.0
    %v686 = vsel %vm339, %v682, 0.0
    %687 = vrot.lane.b32.xlu0 %v571, 111
    %v688 = vpop.permute.xlu0 %687
    %689 = vrot.lane.b32.xlu0 %v572, 111
    %v690 = vpop.permute.xlu0 %689
    %691 = vrot.lane.b32.xlu0 %v573, 111
    %v692 = vpop.permute.xlu0 %691
    %693 = vrot.lane.b32.xlu0 %v574, 111
    %v694 = vpop.permute.xlu0 %693
    %v695 = vsel %vm352, %v692, %v694
    %v696 = vsel %vm352, %v690, %v692
    %v697 = vsel %vm352, %v688, %v690
    %v698 = vsel %vm352, %v694, %v688
    %v699 = vsel %vm375, %v697, 0.0
    %v700 = vsel %vm376, %v696, 0.0
    %v701 = vsel %vm377, %v695, 0.0
    %v702 = vsel %vm378, %v698, 0.0
    %v704 = vsel %vm383, %v62, 0
    %706 = vmatprep.subr.mxu0 %v588
    %707 = vmatpush1.msra.mxu0 %v587
    %708 = vmatprep.subr.mxu0 %v604
    %709 = vmatpush1.msra.mxu0 %v603
    %710 = vmatprep.subr.mxu0 %v620
    %711 = vmatpush1.msra.mxu0 %v619
    %712 = vmatprep.subr.mxu0 %v636
    %713 = vmatpush1.msra.mxu0 %v635
    %714 = vmatprep.subr.mxu0 %v572
    %715 = vmatpush1.msra.mxu0 %v571
    %716 = vmatprep.subr.mxu0 %v652
    %717 = vmatpush1.msra.mxu0 %v651
    %718 = vmatprep.subr.mxu0 %v668
    %719 = vmatpush1.msra.mxu0 %v667
    %720 = vmatprep.subr.mxu0 %v684
    %721 = vmatpush1.msra.mxu0 %v683
    %722 = vmatprep.subr.mxu0 %v700
    %723 = vmatpush1.msra.mxu0 %v699
    %724 = vmatprep.subr.mxu0 0.0
    %725 = vmatpush1.msra.mxu0 0.0
    %726 = vmatprep.subr.mxu0 0.0
    %727 = vmatpush1.msra.mxu0 0.0
    %728 = vmatprep.subr.mxu0 0.0
    %729 = vmatpush1.msra.mxu0 0.0
    %730 = vmatprep.subr.mxu0 0.0
    %731 = vmatpush1.msra.mxu0 0.0
    %732 = vmatprep.subr.mxu0 0.0
    %733 = vmatpush1.msra.mxu0 0.0
    %734 = vmatprep.subr.mxu0 0.0
    %735 = vmatpush1.msra.mxu0 0.0
    %736 = vmatprep.subr.mxu0 0.0
    %737 = vmatpush1.msra.mxu0 0.0
    %738 = vmatprep.subr.mxu0 0.0
    %739 = vmatpush1.msra.mxu0 0.0
    %740 = vmatprep.subr.mxu0 0.0
    %741 = vmatpush1.msra.mxu0 0.0
    %742 = vmatprep.subr.mxu0 0.0
    %743 = vmatpush1.msra.mxu0 0.0
    %744 = vmatprep.subr.mxu0 0.0
    %745 = vmatpush1.msra.mxu0 0.0
    %746 = vmatprep.subr.mxu0 0.0
    %747 = vmatpush1.msra.mxu0 0.0
    %748 = vmatprep.subr.mxu0 0.0
    %749 = vmatpush1.msra.mxu0 0.0
    %750 = vmatprep.subr.mxu0 0.0
    %751 = vmatpush1.msra.mxu0 0.0
    %752 = vmatprep.subr.mxu0 0.0
    %753 = vmatpush1.msra.mxu0 0.0
    %754 = vmatprep.subr.mxu0 0.0
    %755 = vmatpush1.msra.mxu0 0.0
    %756 = vmatprep.subr.mxu0 0.0
    %757 = vmatpush1.msra.mxu0 0.0
    %758 = vmatprep.subr.mxu0 0.0
    %759 = vmatpush1.msra.mxu0 0.0
    %760 = vmatprep.subr.mxu0 0.0
    %761 = vmatpush1.msra.mxu0 0.0
    %762 = vmatprep.subr.mxu0 0.0
    %763 = vmatpush1.msra.mxu0 0.0
    %764 = vmatprep.subr.mxu0 0.0
    %765 = vmatpush1.msra.mxu0 0.0
    %766 = vmatprep.subr.mxu0 0.0
    %767 = vmatpush1.msra.mxu0 0.0
    %768 = vmatprep.subr.mxu0 0.0
    %769 = vmatpush1.msra.mxu0 0.0
    %770 = vmatprep.mubr.f32.mxu0 0.0
    %771 = vmatmul.mubr.f32.gmra.mrb[0].mxu0 %v704
    %v772 = vpop.f32.mrb[0].mxu0
    %v773 = vadd.f32 0.0, %v772
    %v774 = vpop.f32.mrb[0].mxu0
    %v775 = vadd.f32 0.0, %v774
    %776 = vdwg.mxu0
    %777 = vmatprep.subr.mxu0 %v590
    %778 = vmatpush1.msra.mxu0 %v589
    %779 = vmatprep.subr.mxu0 %v606
    %780 = vmatpush1.msra.mxu0 %v605
    %781 = vmatprep.subr.mxu0 %v622
    %782 = vmatpush1.msra.mxu0 %v621
    %783 = vmatprep.subr.mxu0 %v638
    %784 = vmatpush1.msra.mxu0 %v637
    %785 = vmatprep.subr.mxu0 %v574
    %786 = vmatpush1.msra.mxu0 %v573
    %787 = vmatprep.subr.mxu0 %v654
    %788 = vmatpush1.msra.mxu0 %v653
    %789 = vmatprep.subr.mxu0 %v670
    %790 = vmatpush1.msra.mxu0 %v669
    %791 = vmatprep.subr.mxu0 %v686
    %792 = vmatpush1.msra.mxu0 %v685
    %793 = vmatprep.subr.mxu0 %v702
    %794 = vmatpush1.msra.mxu0 %v701
    %795 = vmatprep.subr.mxu0 0.0
    %796 = vmatpush1.msra.mxu0 0.0
    %797 = vmatprep.subr.mxu0 0.0
    %798 = vmatpush1.msra.mxu0 0.0
    %799 = vmatprep.subr.mxu0 0.0
    %800 = vmatpush1.msra.mxu0 0.0
    %801 = vmatprep.subr.mxu0 0.0
    %802 = vmatpush1.msra.mxu0 0.0
    %803 = vmatprep.subr.mxu0 0.0
    %804 = vmatpush1.msra.mxu0 0.0
    %805 = vmatprep.subr.mxu0 0.0
    %806 = vmatpush1.msra.mxu0 0.0
    %807 = vmatprep.subr.mxu0 0.0
    %808 = vmatpush1.msra.mxu0 0.0
    %809 = vmatprep.subr.mxu0 0.0
    %810 = vmatpush1.msra.mxu0 0.0
    %811 = vmatprep.subr.mxu0 0.0
    %812 = vmatpush1.msra.mxu0 0.0
    %813 = vmatprep.subr.mxu0 0.0
    %814 = vmatpush1.msra.mxu0 0.0
    %815 = vmatprep.subr.mxu0 0.0
    %816 = vmatpush1.msra.mxu0 0.0
    %817 = vmatprep.subr.mxu0 0.0
    %818 = vmatpush1.msra.mxu0 0.0
    %819 = vmatprep.subr.mxu0 0.0
    %820 = vmatpush1.msra.mxu0 0.0
    %821 = vmatprep.subr.mxu0 0.0
    %822 = vmatpush1.msra.mxu0 0.0
    %823 = vmatprep.subr.mxu0 0.0
    %824 = vmatpush1.msra.mxu0 0.0
    %825 = vmatprep.subr.mxu0 0.0
    %826 = vmatpush1.msra.mxu0 0.0
    %827 = vmatprep.subr.mxu0 0.0
    %828 = vmatpush1.msra.mxu0 0.0
    %829 = vmatprep.subr.mxu0 0.0
    %830 = vmatpush1.msra.mxu0 0.0
    %831 = vmatprep.subr.mxu0 0.0
    %832 = vmatpush1.msra.mxu0 0.0
    %833 = vmatprep.subr.mxu0 0.0
    %834 = vmatpush1.msra.mxu0 0.0
    %835 = vmatprep.subr.mxu0 0.0
    %836 = vmatpush1.msra.mxu0 0.0
    %837 = vmatprep.subr.mxu0 0.0
    %838 = vmatpush1.msra.mxu0 0.0
    %839 = vmatprep.subr.mxu0 0.0
    %840 = vmatpush1.msra.mxu0 0.0
    %841 = vmatprep.mubr.f32.mxu0 0.0
    %842 = vmatmul.mubr.f32.gmra.mrb[0].mxu0 %v704
    %v843 = vpop.f32.mrb[0].mxu0
    %v844 = vadd.f32 0.0, %v843
    %v845 = vpop.f32.mrb[0].mxu0
    %v846 = vadd.f32 0.0, %v845
    %847 = vdwg.mxu0
    %v848 = vadd.f32 %v773, %v775
    %v849 = vadd.f32 %v848, %v844
    %v850 = vadd.f32 %v849, %v846
    %851 = vadd.xlane.f32.xlu0 %v850
    %v852 = vpop.xlane.xlu0 %851
    %v853 = vmul.f32 %v773, %v773
    %v854 = vmul.f32 %v775, %v775
    %v855 = vmul.f32 %v844, %v844
    %v856 = vmul.f32 %v846, %v846
    %v857 = vadd.f32 %v853, %v854
    %v858 = vadd.f32 %v857, %v855
    %v859 = vadd.f32 %v858, %v856
    %860 = vadd.xlane.f32.xlu0 %v859
    %v861 = vpop.xlane.xlu0 %860
    %v862 = vmul.f32 %v852, 0.001953125
    %v863 = vmul.f32 %v861, 0.001953125
    %v864 = vmul.f32 %v862, %v862
    %v865 = vsub.f32 %v863, %v864
    %v866 = vmax.f32 %v865, 0.0
    %v867 = vadd.f32 %v866, 1e-05
    %v868 = vrsqrt.pop %v867
    %v869 = vmul.f32 %v868, %v65
    %v870 = vmul.f32 %v862, %v869
    %v871 = vsub.f32 %v66, %v870
    %873 = vset.pattern.permute.xlu0 0
    %874 = vperm.xlu0 %873, %v869
    %v875 = vpop.permute.xlu0 %874
    %v877 = vmul.f32 %v773, %v875
    %v878 = vmul.f32 %v775, %v875
    %v879 = vmul.f32 %v844, %v875
    %v880 = vmul.f32 %v846, %v875
    %882 = vset.pattern.permute.xlu0 0
    %883 = vperm.xlu0 %882, %v871
    %v884 = vpop.permute.xlu0 %883
    %v886 = vadd.f32 %v877, %v884
    %v887 = vadd.f32 %v878, %v884
    %v888 = vadd.f32 %v879, %v884
    %v889 = vadd.f32 %v880, %v884
    %v890 = vadd.f32 %v886, %v57
    %v891 = vadd.f32 %v887, %v58
    %v892 = vadd.f32 %v888, %v59
    %v893 = vadd.f32 %v889, %v60
    %v894 = vmax.f32 %v890, 0.0
    %v895 = vmax.f32 %v891, 0.0
    %v896 = vmax.f32 %v892, 0.0
    %v897 = vmax.f32 %v893, 0.0
    %898 = vst [vmem:[#allocation7] sm:$0xff] %v894
    %899 = vst [vmem:[#allocation7 + $0x8] sm:$0xff] %v895
    %900 = vst [vmem:[#allocation7 + $0x10] sm:$0xff] %v896
    %901 = vst [vmem:[#allocation7 + $0x18] sm:$0xff] %v897
    // Predicated region
    $region46: #{tpu_custom_call.1} parent=1 // pred_check
      _
    $region47: #{tpu_custom_call.1} parent=1 // pred_check_branch
      %903 = sbr.rel (0) target = $region49
    $region48: #{tpu_custom_call.1} parent=1 // pred_region
      %s905 = ssub.s32 512, 512
      %906 = vsyncadd [#allocation4], %s905
      %s908 = sshll.u32 [#allocation7], 4
      %s909 = int_to_ptr.vmem [resolvable:$true] %s908
      %911 = dma.vmem_to_hbm [thread:$0]  %s909, 512, %s9, [#allocation4]
    $region49: #{tpu_custom_call.1} parent=1 // pred_fallthru
      _
    // Predicated region
    $region50: #{tpu_custom_call.1} parent=1 // pred_check
      _
    $region51: #{tpu_custom_call.1} parent=1 // pred_check_branch
      %913 = sbr.rel (0) target = $region53
    $region52: #{tpu_custom_call.1} parent=1 // pred_region
      %914 = dma.done [#allocation4], 512
    $region53: #{tpu_custom_call.1} parent=1 // pred_fallthru
      _
    %915 = vsyncpa [#allocation3], 1
    %916 = vsyncpa [#allocation6], 1
    %917 = vsyncpa [#allocation4], 1

</llo_original>
